<compile_context>
chip_gen: v6e
topology: v6e:2x2x1
jax: 0.10.0
libtpu: 0.0.40
codegen_flags: <defaults>
</compile_context>

<pallas_src>
import jax
import jax.numpy as jnp
from jax.experimental import pallas as pl
from jax.experimental.pallas import tpu as pltpu


def _round_up(x, m):
    return ((x + m - 1) // m) * m


def _vmem_capacity_bytes():
    """Physical VMEM per core; falls back to the smallest generation (v7x, 64 MiB)."""
    try:
        cap = int(getattr(pltpu.get_tpu_info(), "vmem_capacity_bytes", 0) or 0)
        if cap > 0:
            return cap
    except Exception:
        pass
    return 64 << 20


def _pick_divisor_tile(dim, pref):
    """Largest multiple of 128 that divides `dim` (dim % 128 == 0) and is <= pref."""
    q = dim // 128
    p = max(pref // 128, 1)
    if p >= q:
        return dim
    for d in range(p, 0, -1):
        if q % d == 0:
            return 128 * d
    return 128


# ---------------------------------------------------------------------------
# Kernels (built by a small factory: bias / no-bias  x  single / inplace / scratch)
# ---------------------------------------------------------------------------
def _make_linear_kernel(has_bias, mode):
    """mode: 'single'  -> one K step, no accumulator state
             'inplace' -> multi-K, accumulate directly into the f32 output block
             'scratch' -> multi-K, f32 VMEM accumulator, final cast to out dtype
    """

    def kernel(*refs):
        refs = list(refs)
        acc_ref = refs.pop() if mode == "scratch" else None
        o_ref = refs.pop()
        if has_bias:
            x_ref, w_ref, b_ref = refs
        else:
            (x_ref, w_ref), b_ref = refs, None

        partial = jnp.dot(x_ref[...], w_ref[...],
                          preferred_element_type=jnp.float32)

        if mode == "single":
            if b_ref is not None:
                partial = partial + b_ref[...]
            o_ref[...] = partial.astype(o_ref.dtype)
            return

        acc = acc_ref if mode == "scratch" else o_ref
        k = pl.program_id(2)

        @pl.when(k == 0)
        def _():
            # Bias folded into the first matmul: no separate init/store pass.
            if b_ref is not None:
                acc[...] = partial + b_ref[...]
            else:
                acc[...] = partial

        @pl.when(k > 0)
        def _():
            acc[...] += partial

        if mode == "scratch":
            @pl.when(k == pl.num_programs(2) - 1)
            def _():
                o_ref[...] = acc[...].astype(o_ref.dtype)

    return kernel


# ---------------------------------------------------------------------------
# Wrapper
# ---------------------------------------------------------------------------
def linear_pallas(x, weight_t, bias=None, *, out_features=None, tm=None, tn=None,
                  tk=None, compute_dtype=None, out_dtype=None, force_pallas=False):
    """y = x @ weight_t + bias.

    `weight_t` is the TRANSPOSED weight, laid out [in_features(_pad), out_features(_pad)],
    ideally pre-padded to 128-multiples (done once in LinearConnector.__init__).
    `bias` may be a 1-D [N] vector or a pre-padded (1, N_pad) row.
    """
    orig_shape = x.shape
    K = orig_shape[-1]
    x2d = x.reshape(-1, K)
    M = x2d.shape[0]
    out_dtype = x.dtype if out_dtype is None else out_dtype

    # Normalize / (re)pad the weight only if the caller did not pre-pad it.
    Kw, Nw = weight_t.shape
    K_p, N_p = _round_up(Kw, 128), _round_up(Nw, 128)
    if (K_p, N_p) != (Kw, Nw):
        weight_t = jnp.pad(weight_t, ((0, K_p - Kw), (0, N_p - Nw)))
    N = Nw if out_features is None else out_features
    assert K <= K_p and N <= N_p

    has_bias = bias is not None
    if has_bias:
        b2d = jnp.asarray(bias, jnp.float32).reshape(1, -1)
        if b2d.shape[1] != N_p:
            b2d = jnp.pad(b2d, ((0, 0), (0, N_p - b2d.shape[1])))
    else:
        b2d = None

    # Tiny problems: XLA's fused matmul beats Pallas launch + per-step overhead.
    if not force_pallas and (M * N_p * K_p) < (1 << 21):
        xk = x2d if K == K_p else jnp.pad(x2d, ((0, 0), (0, K_p - K)))
        wt = weight_t
        if compute_dtype is not None:
            xk, wt = xk.astype(compute_dtype), wt.astype(compute_dtype)
        y = jnp.dot(xk, wt, preferred_element_type=jnp.float32)
        if has_bias:
            y = y + b2d
        return y[:, :N].astype(out_dtype).reshape(*orig_shape[:-1], N)

    # Optional low-precision MXU feed (accumulation stays f32 either way).
    if compute_dtype is None and x2d.dtype != weight_t.dtype:
        compute_dtype = jnp.promote_types(x2d.dtype, weight_t.dtype)
    if compute_dtype is not None:
        x2d = x2d.astype(compute_dtype)
        weight_t = weight_t.astype(compute_dtype)
    itemsize = jnp.dtype(x2d.dtype).itemsize
    out_itemsize = jnp.dtype(out_dtype).itemsize
    out_is_f32 = jnp.dtype(out_dtype) == jnp.dtype(jnp.float32)

    cap = _vmem_capacity_bytes()
    budget = int(cap * 0.85)          # keep headroom for Mosaic internal scratch
    big_vmem = cap >= (100 << 20)     # v5e / v6e (128 MiB) vs v7x (64 MiB)

    # Generation- and dtype-aware tile defaults, sized toward each chip's
    # MXU/HBM ridge point.
    if itemsize <= 2:
        tm_d, tn_d, tk_d = (1024, 2048, 1024) if big_vmem else (512, 1024, 1024)
    else:
        tm_d, tn_d, tk_d = (512, 1024, 1024) if big_vmem else (512, 512, 1024)
    tk_user = tk is not None
    tm = tm_d if tm is None else tm
    tn = tn_d if tn is None else tn
    tk = tk_d if tk is None else tk

    # Clamp to the problem.  Sub-32-bit dtypes pack rows along sublanes, so the
    # sublane granule for tm is dtype dependent.  tn / tk are chosen as
    # multiples of 128 that exactly divide the pre-padded weight dims, so the
    # grid is exact division and the weight is never re-padded per call.
    sub = {4: 8, 2: 16, 1: 32}.get(itemsize, 8)
    tm = max(sub, _round_up(min(tm, _round_up(M, sub)), sub))
    tn = _pick_divisor_tile(N_p, tn)
    tk = _pick_divisor_tile(K_p, tk)

    def _footprint(tm_, tn_, tk_, nk_):
        f = 2 * (tm_ * tk_ + tk_ * tn_) * itemsize     # double-buffered x, W tiles
        f += 2 * tm_ * tn_ * out_itemsize              # double-buffered output tile
        if has_bias:
            f += 2 * tn_ * 4
        if nk_ > 1 and not out_is_f32:
            f += tm_ * tn_ * 4                         # f32 accumulator scratch
        return f

    # Prefer a single K step (scratch-free kernel, no accumulator RMW, fewer
    # grid steps) whenever it comfortably fits VMEM.
    if not tk_user and tk < K_p and _footprint(tm, tn, K_p, 1) <= int(0.7 * budget):
        tk = K_p

    # If (caller-supplied) tiles blow the budget, shrink — tk first since it
    # does not reduce arithmetic intensity.
    while _footprint(tm, tn, tk, K_p // tk) > budget:
        if tk > 128:
            tk = _pick_divisor_tile(K_p, tk // 2)
        elif tn > 128:
            tn = _pick_divisor_tile(N_p, tn // 2)
        elif tm > sub:
            tm = max(sub, (tm // 2) // sub * sub)
        else:
            break

    # v7x has 2 TensorCores: make sure the parallel (i, j) grid has >= 2 blocks.
    if not big_vmem and (_round_up(M, tm) // tm) * (N_p // tn) < 2:
        tn_half = _pick_divisor_tile(N_p, max(tn // 2, 128))
        if N_p // tn_half >= 2:
            tn = tn_half
        else:
            tm_half = max(sub, (tm // 2) // sub * sub)
            if M > tm_half:
                tm = tm_half

    M_pad = _round_up(M, tm)
    nm, nn, nk = M_pad // tm, N_p // tn, K_p // tk
    vmem_bytes = _footprint(tm, tn, tk, nk)
    vmem_limit = int(min(budget, max(2 * vmem_bytes, 16 << 20)))

    # Zero-pad the activation only (pure glue; zeros in K contribute nothing).
    if (M_pad, K_p) != (M, K):
        x2d = jnp.pad(x2d, ((0, M_pad - M), (0, K_p - K)))

    if nk == 1:
        mode, scratch = "single", []
    elif out_is_f32:
        mode, scratch = "inplace", []       # accumulate straight into o_ref
    else:
        mode, scratch = "scratch", [pltpu.VMEM((tm, tn), jnp.float32)]

    in_specs = [
        pl.BlockSpec((tm, tk), lambda i, j, k: (i, k)),
        pl.BlockSpec((tk, tn), lambda i, j, k: (k, j)),
    ]
    operands = [x2d, weight_t]
    if has_bias:
        in_specs.append(pl.BlockSpec((1, tn), lambda i, j, k: (0, j)))
        operands.append(b2d)

    out = pl.pallas_call(
        _make_linear_kernel(has_bias, mode),
        out_shape=jax.ShapeDtypeStruct((M_pad, N_p), out_dtype),
        grid_spec=pltpu.PrefetchScalarGridSpec(
            num_scalar_prefetch=0,
            grid=(nm, nn, nk),
            in_specs=in_specs,
            out_specs=pl.BlockSpec((tm, tn), lambda i, j, k: (i, j)),
            scratch_shapes=scratch,
        ),
        compiler_params=pltpu.CompilerParams(
            dimension_semantics=("parallel", "parallel", "arbitrary"),
            vmem_limit_bytes=vmem_limit,
        ),
    )(*operands)

    out = out[:M, :N]
    return out.reshape(*orig_shape[:-1], N)


class LinearConnector:
    """JAX/Pallas equivalent of the PyTorch LinearConnector (nn.Linear) module.

    The weight is stored pre-transposed ([in, out]) and pre-padded to
    128-multiples once at init, so the forward pass never pays an extra HBM
    pass for weight.T / jnp.pad.
    """

    def __init__(self, in_features, out_features, bias=True, key=None):
        key = jax.random.PRNGKey(0) if key is None else key
        kw, kb = jax.random.split(key)
        bound = 1.0 / (in_features ** 0.5)
        w = jax.random.uniform(kw, (out_features, in_features), jnp.float32,
                               -bound, bound)
        self.in_features = in_features
        self.out_features = out_features
        k_p = _round_up(in_features, 128)
        n_p = _round_up(out_features, 128)
        w_t = w.T                                       # [in, out]
        if (k_p, n_p) != (in_features, out_features):
            w_t = jnp.pad(w_t, ((0, k_p - in_features), (0, n_p - out_features)))
        self.weight_t = w_t                             # [K_pad, N_pad]
        if bias:
            b = jax.random.uniform(kb, (out_features,), jnp.float32, -bound, bound)
            self.bias2d = jnp.pad(b.reshape(1, -1), ((0, 0), (0, n_p - out_features)))
        else:
            self.bias2d = None

    # Reference-layout views (match nn.Linear's .weight / .bias).
    @property
    def weight(self):
        return self.weight_t[: self.in_features, : self.out_features].T

    @property
    def bias(self):
        return None if self.bias2d is None else self.bias2d[0, : self.out_features]

    def __call__(self, x, **kwargs):
        return linear_pallas(x, self.weight_t, self.bias2d,
                             out_features=self.out_features, **kwargs)


if __name__ == "__main__":
    batch, seq, in_features, out_features = 2, 8, 32, 64
    key = jax.random.PRNGKey(0)
    kx, kp, kx2, kp2, kp3 = jax.random.split(key, 5)

    # Case 1: small f32 with bias -> single-K, scratch-free kernel.
    x = jax.random.normal(kx, (batch, seq, in_features), jnp.float32)
    connector = LinearConnector(in_features, out_features, bias=True, key=kp)
    y = jax.block_until_ready(connector(x, force_pallas=True))
    y_ref = x @ connector.weight.T + connector.bias
    assert y.shape == (batch, seq, out_features)
    assert jnp.allclose(y, y_ref, atol=2e-2, rtol=2e-2), "case 1 mismatch"

    # Case 2: K=640 with tk forced to 128 -> multi-K path; f32 output
    # accumulates directly into o_ref (bias fused into the first matmul).
    in2, out2 = 640, 256
    x2 = jax.random.normal(kx2, (batch, seq, in2), jnp.float32)
    conn2 = LinearConnector(in2, out2, bias=True, key=kp2)
    y2 = jax.block_until_ready(conn2(x2, force_pallas=True, tk=128))
    y2_ref = x2 @ conn2.weight.T + conn2.bias
    assert y2.shape == (batch, seq, out2)
    assert jnp.allclose(y2, y2_ref, atol=2e-2, rtol=2e-2), "case 2 mismatch"

    # Case 3: bf16 activations + bf16 MXU feed, multi-K -> f32 scratch
    # accumulator with a final cast to bf16.
    x2_bf = x2.astype(jnp.bfloat16)
    y3 = jax.block_until_ready(
        conn2(x2_bf, force_pallas=True, tk=128, compute_dtype=jnp.bfloat16))
    y3_ref = x2_bf.astype(jnp.float32) @ conn2.weight.T + conn2.bias
    assert y3.dtype == jnp.bfloat16
    assert jnp.allclose(y3.astype(jnp.float32), y3_ref, atol=1e-1, rtol=1e-1), \
        "case 3 mismatch"

    # Case 4: no bias -> bias-free kernel variant.
    conn3 = LinearConnector(in_features, out_features, bias=False, key=kp3)
    y4 = jax.block_until_ready(conn3(x, force_pallas=True))
    y4_ref = x @ conn3.weight.T
    assert jnp.allclose(y4, y4_ref, atol=2e-2, rtol=2e-2), "case 4 mismatch"

    print("KERNEL_OK")
</pallas_src>

<mosaic_0001>
module attributes {stable_mosaic.version = 11 : i64} {
  func.func @kernel(%arg0: i32, %arg1: i32, %arg2: i32, %arg3: memref<8x128xf32, #tpu.memory_space<vmem>>, %arg4: memref<128x128xf32, #tpu.memory_space<vmem>>, %arg5: memref<1x128xf32, #tpu.memory_space<vmem>>, %arg6: memref<8x128xf32, #tpu.memory_space<vmem>>) attributes {dimension_semantics = [#tpu.dimension_semantics<parallel>, #tpu.dimension_semantics<parallel>, #tpu.dimension_semantics<arbitrary>], iteration_bounds = array<i64: 2, 1, 1>, scalar_prefetch = 0 : i64, scratch_operands = 0 : i64, tpu.core_type = #tpu.core_type<tc>, window_params = [{transform_indices = @transform_0, window_bounds = array<i64: 8, 128>}, {transform_indices = @transform_1, window_bounds = array<i64: 128, 128>}, {transform_indices = @transform_2, window_bounds = array<i64: 1, 128>}, {transform_indices = @transform_3, window_bounds = array<i64: 8, 128>}]} {
    %c0 = arith.constant 0 : index
    %c0_0 = arith.constant 0 : index
    %0 = vector.load %arg3[%c0, %c0_0] : memref<8x128xf32, #tpu.memory_space<vmem>>, vector<8x128xf32>
    %c0_1 = arith.constant 0 : index
    %c0_2 = arith.constant 0 : index
    %1 = vector.load %arg4[%c0_1, %c0_2] : memref<128x128xf32, #tpu.memory_space<vmem>>, vector<128x128xf32>
    %cst = arith.constant dense<0.000000e+00> : vector<8x128xf32>
    %2 = tpu.matmul %0, %1, %cst {dimension_numbers = #tpu.dot_dimension_numbers<[1], [0], [0], [1], [0, 0, 1, 1], [], []>} : vector<8x128xf32>, vector<128x128xf32>, vector<8x128xf32> -> vector<8x128xf32>
    %c0_3 = arith.constant 0 : index
    %c0_4 = arith.constant 0 : index
    %3 = vector.load %arg5[%c0_3, %c0_4] : memref<1x128xf32, #tpu.memory_space<vmem>>, vector<1x128xf32>
    %4 = vector.broadcast %3 : vector<1x128xf32> to vector<8x128xf32>
    %5 = arith.addf %2, %4 : vector<8x128xf32>
    %c0_5 = arith.constant 0 : index
    %c0_6 = arith.constant 0 : index
    %6 = vector.load %arg6[%c0_5, %c0_6] : memref<8x128xf32, #tpu.memory_space<vmem>>, vector<8x128xf32>
    tpu.vector_store %arg6[%c0_5, %c0_6], %5 {strides = array<i32>} : memref<8x128xf32, #tpu.memory_space<vmem>>, vector<8x128xf32>,
    return
  }
  func.func @transform_0(%arg0: i32, %arg1: i32, %arg2: i32) -> (i32, i32) {
    %c0_i32 = arith.constant 0 : i32
    return %arg0, %arg2 : i32, i32
  }
  func.func @transform_1(%arg0: i32, %arg1: i32, %arg2: i32) -> (i32, i32) {
    %c0_i32 = arith.constant 0 : i32
    return %arg2, %arg1 : i32, i32
  }
  func.func @transform_2(%arg0: i32, %arg1: i32, %arg2: i32) -> (i32, i32) {
    %c0_i32 = arith.constant 0 : i32
    %c0_i32_0 = arith.constant 0 : i32
    return %c0_i32, %arg1 : i32, i32
  }
  func.func @transform_3(%arg0: i32, %arg1: i32, %arg2: i32) -> (i32, i32) {
    %c0_i32 = arith.constant 0 : i32
    return %arg0, %arg1 : i32, i32
  }
}

</mosaic_0001>

<llo_original>
// kernel: tpu_custom_call.1
$region0: #{tpu_custom_call.1}
  #allocation0 [shape = 'u32[]', space=smem, size = 0x4, offset = 0x4, fixed_abs, tag = 'smem constant byte address 0x4 - core index']
  #allocation1 [shape = 'u32[144,128]{1,0:T(1,128)}', space=vmem, size = 0x12000, scoped, tag = 'internal scratch']
  %s0 = inlined_call_operand.hbm [shape: f32[16,128], index: 0, kind: input, shape index: {}]
  %s1 = inlined_call_operand.hbm [shape: f32[128,128], index: 1, kind: input, shape index: {}]
  %s2 = inlined_call_operand.vmem [shape: f32[1,128], index: 2, kind: input, shape index: {}]
  %s3 = inlined_call_operand.hbm [shape: f32[16,128], index: 3, kind: output, shape index: {}]
  %s4 = sld [smem:[#allocation0]]
  $region53: #{tpu_custom_call.1} parent=0
    _
  %s6 = ssub.s32 1, %s4
  %s7 = scalar_select 0, %s6, %s4
  $region1: #{tpu_custom_call.1} parent=0
    #allocation2 [shape = 'u8[8192]{0}', space=vmem, size = 0x2000, scoped, tag = 'input window, operand 0']
    #allocation3 [shape = 's32[2]{0}', space=sflag, size = 0x8, scoped, tag = 'scoped memory for tpu_custom_call.1']
    #allocation4 [shape = 's32[2]{0}', space=sflag, size = 0x8, scoped, tag = 'scoped memory for tpu_custom_call.1']
    #allocation5 [shape = 'u8[65536]{0}', space=vmem, size = 0x10000, scoped, tag = 'input window, operand 1, single buffered']
    #allocation6 [shape = 's32[1]{0}', space=sflag, size = 0x4, scoped, tag = 'scoped memory for tpu_custom_call.1']
    #allocation7 [shape = 'u8[8192]{0}', space=vmem, size = 0x2000, scoped, tag = 'output window, operand 0']
    %8 = vsyncpa [#allocation3], 0
    %s9 = scalar_lea.sflag [#allocation3], 1
    %10 = vsyncpa %s9, 0
    %11 = vsyncpa [#allocation6], 0
    %12 = vsyncpa [#allocation4], 0
    %s13 = scalar_lea.sflag [#allocation4], 1
    %14 = vsyncpa %s13, 0
    loop: start=0, step=1, limit=4
    $region2: #{tpu_custom_call.1} parent=1 // loop_pre_header
      _
    $region3: #{tpu_custom_call.1} parent=1 // loop_header
      %s16 = sphi 0, %s20
      %p17 = scmp.ge.s32.totalorder %s16, 4
      %s23 = sphi 0, %s42
      %s24 = sphi 0, %s38
      %s25 = sphi 0, %s34
      %s26 = sphi 0, %s23
      %s27 = sphi 0, %s24
      %s28 = sphi 0, %s25
      %s29 = sphi 0, %s26
      %s30 = sphi 0, %s27
      %s31 = sphi 0, %s28
      %s47 = sphi 0, %s49
      %s50 = sphi 0, %s47
      %s51 = sphi 0, %s50
      %s67 = sphi 0, %s51
      %s75 = sphi 0, %s77
      %s78 = sphi 0, %s75
      %s79 = sphi 0, %s78
      %s95 = sphi 0, %s79
      %s101 = sphi 0, %s103
      %s104 = sphi 0, %s101
      %s105 = sphi 0, %s104
      %s121 = sphi 0, %s105
      %s129 = sphi 0, %s131
      %s132 = sphi 0, %s129
      %s133 = sphi 0, %s132
      %s149 = sphi 0, %s133
    $region4: #{tpu_custom_call.1} parent=1 // loop_header_branch
      %19 = sbr.rel (%p17) target = $region8
    $region5: #{tpu_custom_call.1} parent=1 // loop_body
      %s21 = ssub.s32 %s16, 1
      %s22 = ssub.s32 %s16, 2
      %s32 = sadd.s32 1, %s25
      %p33 = scmp.ge.s32.totalorder %s32, 1
      %s34 = scalar_select %p33, 0, %s32
      %s35 = sadd.s32 1, %s24
      %s36 = scalar_select %p33, %s35, %s24
      %p37 = scmp.ge.s32.totalorder %s36, 1
      %s38 = scalar_select %p37, 0, %s36
      %s39 = sadd.s32 1, %s23
      %s40 = scalar_select %p37, %s39, %s23
      %p41 = scmp.ge.s32.totalorder %s40, 2
      %s42 = scalar_select %p41, 0, %s40
      %s43 = ssub.s32 %s23, %s42
      %s44 = ssub.s32 %s25, %s34
      %s45 = sor.u32 %s43, %s44
      %p46 = scmp.eq.s32.totalorder %s45, 0
      %s48 = sadd.s32 %s47, 1
      %s49 = scalar_select %p46, %s47, %s48
      %p52 = pneg %p46
      %p53 = scmp.eq.s32.totalorder %s16, 1
      %p54 = por %p52, %p53
      %p55 = scmp.ne.s32.totalorder %s47, %s50
      %p56 = scmp.eq.s32.totalorder %s16, 0
      %p57 = por %p55, %p56
      %p58 = scmp.ne.s32.totalorder %s47, %s50
      %p59 = scmp.eq.s32.totalorder %s21, 1
      %p60 = por %p58, %p59
      %p61 = scmp.ne.s32.totalorder %s50, %s51
      %p62 = scmp.eq.s32.totalorder %s21, 0
      %p63 = por %p61, %p62
      %p64 = scmp.ne.s32.totalorder %s50, %s51
      %p65 = scmp.eq.s32.totalorder %s22, 1
      %p66 = por %p64, %p65
      %p68 = scmp.ne.s32.totalorder %s51, %s67
      %p69 = scmp.eq.s32.totalorder %s22, 0
      %p70 = por %p68, %p69
      %s71 = ssub.s32 %s25, %s34
      %s72 = ssub.s32 %s24, %s38
      %s73 = sor.u32 %s71, %s72
      %p74 = scmp.eq.s32.totalorder %s73, 0
      %s76 = sadd.s32 %s75, 1
      %s77 = scalar_select %p74, %s75, %s76
      %p80 = pneg %p74
      %p81 = scmp.eq.s32.totalorder %s16, 1
      %p82 = por %p80, %p81
      %p83 = scmp.ne.s32.totalorder %s75, %s78
      %p84 = scmp.eq.s32.totalorder %s16, 0
      %p85 = por %p83, %p84
      %p86 = scmp.ne.s32.totalorder %s75, %s78
      %p87 = scmp.eq.s32.totalorder %s21, 1
      %p88 = por %p86, %p87
      %p89 = scmp.ne.s32.totalorder %s78, %s79
      %p90 = scmp.eq.s32.totalorder %s21, 0
      %p91 = por %p89, %p90
      %p92 = scmp.ne.s32.totalorder %s78, %s79
      %p93 = scmp.eq.s32.totalorder %s22, 1
      %p94 = por %p92, %p93
      %p96 = scmp.ne.s32.totalorder %s79, %s95
      %p97 = scmp.eq.s32.totalorder %s22, 0
      %p98 = por %p96, %p97
      %s99 = ssub.s32 %s24, %s38
      %p100 = scmp.eq.s32.totalorder %s99, 0
      %s102 = sadd.s32 %s101, 1
      %s103 = scalar_select %p100, %s101, %s102
      %p106 = pneg %p100
      %p107 = scmp.eq.s32.totalorder %s16, 1
      %p108 = por %p106, %p107
      %p109 = scmp.ne.s32.totalorder %s101, %s104
      %p110 = scmp.eq.s32.totalorder %s16, 0
      %p111 = por %p109, %p110
      %p112 = scmp.ne.s32.totalorder %s101, %s104
      %p113 = scmp.eq.s32.totalorder %s21, 1
      %p114 = por %p112, %p113
      %p115 = scmp.ne.s32.totalorder %s104, %s105
      %p116 = scmp.eq.s32.totalorder %s21, 0
      %p117 = por %p115, %p116
      %p118 = scmp.ne.s32.totalorder %s104, %s105
      %p119 = scmp.eq.s32.totalorder %s22, 1
      %p120 = por %p118, %p119
      %p122 = scmp.ne.s32.totalorder %s105, %s121
      %p123 = scmp.eq.s32.totalorder %s22, 0
      %p124 = por %p122, %p123
      %s125 = ssub.s32 %s23, %s42
      %s126 = ssub.s32 %s24, %s38
      %s127 = sor.u32 %s125, %s126
      %p128 = scmp.eq.s32.totalorder %s127, 0
      %s130 = sadd.s32 %s129, 1
      %s131 = scalar_select %p128, %s129, %s130
      %p134 = pneg %p128
      %p135 = scmp.eq.s32.totalorder %s16, 1
      %p136 = por %p134, %p135
      %p137 = scmp.ne.s32.totalorder %s129, %s132
      %p138 = scmp.eq.s32.totalorder %s16, 0
      %p139 = por %p137, %p138
      %p140 = scmp.ne.s32.totalorder %s129, %s132
      %p141 = scmp.eq.s32.totalorder %s21, 1
      %p142 = por %p140, %p141
      %p143 = scmp.ne.s32.totalorder %s132, %s133
      %p144 = scmp.eq.s32.totalorder %s21, 0
      %p145 = por %p143, %p144
      %p146 = scmp.ne.s32.totalorder %s132, %s133
      %p147 = scmp.eq.s32.totalorder %s22, 1
      %p148 = por %p146, %p147
      %p150 = scmp.ne.s32.totalorder %s133, %s149
      %p151 = scmp.eq.s32.totalorder %s22, 0
      %p152 = por %p150, %p151
      %p153 = scmp.le.s32.totalorder 1, %s16
      %p154 = scmp.lt.s32.totalorder %s16, 3
      %p155 = pnand %p153, %p154
      %p156 = pneg %p155
      // Predicated region
      $region9: #{tpu_custom_call.1} parent=5 // pred_check
        _
      $region10: #{tpu_custom_call.1} parent=5 // pred_check_branch
        %158 = sbr.rel (%p155) target = $region12
      $region11: #{tpu_custom_call.1} parent=5 // pred_region
        %s159 = ssub.s32 %s16, 1
        // Predicated region
        $region13: #{tpu_custom_call.1} parent=11 // pred_check
          %p160 = pneg %p91
        $region14: #{tpu_custom_call.1} parent=11 // pred_check_branch
          %162 = sbr.rel (%p160) target = $region16
        $region15: #{tpu_custom_call.1} parent=11 // pred_region
          %s163 = smul.u32 16, %s28
          %s165 = ssub.s32 2048, 2048
          %166 = vsyncadd [#allocation6], %s165
          %s167 = sadd.s32 %s27, %s163
          %s168 = smul.addr %s167, 128
          %s169 = scalar_lea.hbm %s1, %s168
          %s170 = sshll.u32 [#allocation5], 4
          %s171 = int_to_ptr.vmem [resolvable:$true] %s170
          %176 = dma.hbm_to_vmem [thread:$0]  %s169, 2048, %s171, [#allocation6], 128, 128, 8
        $region16: #{tpu_custom_call.1} parent=11 // pred_fallthru
          _
        // Predicated region
        $region17: #{tpu_custom_call.1} parent=11 // pred_check
          %p177 = pneg %p117
        $region18: #{tpu_custom_call.1} parent=11 // pred_check_branch
          %179 = sbr.rel (%p177) target = $region20
        $region19: #{tpu_custom_call.1} parent=11 // pred_region
          %p180 = scmp.lt.s32.totalorder %s27, 0
          %s181 = scalar_select %p180, %s27, 0
          %s182 = scalar_lea.vmem %s2, %s181
        $region20: #{tpu_custom_call.1} parent=11 // pred_fallthru
          _
      $region12: #{tpu_custom_call.1} parent=5 // pred_fallthru
        _
      %p183 = scmp.lt.s32.totalorder %s16, 2
      // Predicated region
      $region21: #{tpu_custom_call.1} parent=5 // pred_check
        %p184 = pneg %p183
      $region22: #{tpu_custom_call.1} parent=5 // pred_check_branch
        %186 = sbr.rel (%p184) target = $region24
      $region23: #{tpu_custom_call.1} parent=5 // pred_region
        // Predicated region
        $region25: #{tpu_custom_call.1} parent=23 // pred_check
          %p187 = pneg %p57
        $region26: #{tpu_custom_call.1} parent=23 // pred_check_branch
          %189 = sbr.rel (%p187) target = $region28
        $region27: #{tpu_custom_call.1} parent=23 // pred_region
          %s190 = sand.u32 %s47, 1
          %s191 = scalar_lea.sflag [#allocation3], %s190
          %s192 = sand.u32 %s47, 1
          %s193 = smul.addr %s192, 8
          %s194 = scalar_lea.vmem [#allocation2], %s193
          %s196 = ssub.s32 128, 128
          %197 = vsyncadd %s191, %s196
          %s198 = sadd.s32 %s25, %s23
          %s199 = smul.addr %s198, 128
          %s200 = scalar_lea.hbm %s0, %s199
          %s202 = sshll.u32 %s194, 4
          %s203 = int_to_ptr.vmem [resolvable:$true] %s202
          %205 = dma.hbm_to_vmem [thread:$0]  %s200, 128, %s203, %s191
        $region28: #{tpu_custom_call.1} parent=23 // pred_fallthru
          _
      $region24: #{tpu_custom_call.1} parent=5 // pred_fallthru
        _
      %p206 = scmp.le.s32.totalorder 1, %s16
      %p207 = scmp.lt.s32.totalorder %s16, 3
      %p208 = pnand %p206, %p207
      %p209 = pneg %p208
      // Predicated region
      $region29: #{tpu_custom_call.1} parent=5 // pred_check
        _
      $region30: #{tpu_custom_call.1} parent=5 // pred_check_branch
        %211 = sbr.rel (%p208) target = $region32
      $region31: #{tpu_custom_call.1} parent=5 // pred_region
        %s212 = ssub.s32 %s16, 1
        %s213 = sand.u32 %s50, 1
        %s214 = scalar_lea.sflag [#allocation3], %s213
        %s215 = sand.u32 %s50, 1
        %s216 = smul.addr %s215, 8
        %s217 = scalar_lea.vmem [#allocation2], %s216
        // Predicated region
        $region33: #{tpu_custom_call.1} parent=31 // pred_check
          %p218 = pneg %p63
        $region34: #{tpu_custom_call.1} parent=31 // pred_check_branch
          %220 = sbr.rel (%p218) target = $region36
        $region35: #{tpu_custom_call.1} parent=31 // pred_region
          %221 = dma.done %s214, 128
        $region36: #{tpu_custom_call.1} parent=31 // pred_fallthru
          _
        // Predicated region
        $region37: #{tpu_custom_call.1} parent=31 // pred_check
          %p222 = pneg %p91
        $region38: #{tpu_custom_call.1} parent=31 // pred_check_branch
          %224 = sbr.rel (%p222) target = $region40
        $region39: #{tpu_custom_call.1} parent=31 // pred_region
          %225 = dma.done [#allocation6], 2048
        $region40: #{tpu_custom_call.1} parent=31 // pred_fallthru
          _
        %s226 = sand.u32 %s50, 1
        %s227 = scalar_lea.sflag [#allocation3], %s226
        %s228 = sand.u32 %s50, 1
        %s229 = smul.addr %s228, 8
        %s230 = scalar_lea.vmem [#allocation2], %s229
        %p231 = pneg %p63
        %p232 = pneg %p60
        %p233 = pneg %p91
        %p234 = pneg %p88
        %p235 = scmp.lt.s32.totalorder %s27, 0
        %s236 = scalar_select %p235, %s27, 0
        %s237 = scalar_lea.vmem %s2, %s236
        %p238 = pneg %p117
        %p239 = pneg %p114
        %p240 = pneg %p145
        %p241 = pneg %p142
        %s242 = sand.u32 %s132, 1
        %s243 = scalar_lea.sflag [#allocation4], %s242
        %s244 = sand.u32 %s132, 1
        %s245 = smul.addr %s244, 8
        %s246 = scalar_lea.vmem [#allocation7], %s245
        %s247 = smul.u32 16, %s28
        %p248 = scmp.lt.s32.totalorder %s27, 0
        %s249 = scalar_select %p248, %s27, 0
        %s250 = scalar_lea.vmem %s2, %s249
        %v251 = vld [vmem:[%s217] sm:$0xff]
        %v252 = vld [vmem:[#allocation5] sm:$0xff]
        %v253 = vld [vmem:[#allocation5 + $0x8] sm:$0xff]
        %v254 = vld [vmem:[#allocation5 + $0x10] sm:$0xff]
        %v255 = vld [vmem:[#allocation5 + $0x18] sm:$0xff]
        %v256 = vld [vmem:[#allocation5 + $0x20] sm:$0xff]
        %v257 = vld [vmem:[#allocation5 + $0x28] sm:$0xff]
        %v258 = vld [vmem:[#allocation5 + $0x30] sm:$0xff]
        %v259 = vld [vmem:[#allocation5 + $0x38] sm:$0xff]
        %v260 = vld [vmem:[#allocation5 + $0x40] sm:$0xff]
        %v261 = vld [vmem:[#allocation5 + $0x48] sm:$0xff]
        %v262 = vld [vmem:[#allocation5 + $0x50] sm:$0xff]
        %v263 = vld [vmem:[#allocation5 + $0x58] sm:$0xff]
        %v264 = vld [vmem:[#allocation5 + $0x60] sm:$0xff]
        %v265 = vld [vmem:[#allocation5 + $0x68] sm:$0xff]
        %v266 = vld [vmem:[#allocation5 + $0x70] sm:$0xff]
        %v267 = vld [vmem:[#allocation5 + $0x78] sm:$0xff]
        %v268 = vld [vmem:[%s250] sm:$0x1]
        %v270 = vlaneseq
        %v271 = vshrl.u32 %v270, 7
        %v272 = vsub.s32 0, %v271
        %v273 = vrot.slane %v268, %v272
        %275 = vmatprep.subr.mxu0 0.0
        %276 = vmatpush1.msra.mxu0 %v267
        %277 = vmatprep.subr.mxu0 0.0
        %278 = vmatpush1.msra.mxu0 %v266
        %279 = vmatprep.subr.mxu0 0.0
        %280 = vmatpush1.msra.mxu0 %v265
        %281 = vmatprep.subr.mxu0 0.0
        %282 = vmatpush1.msra.mxu0 %v264
        %283 = vmatprep.subr.mxu0 0.0
        %284 = vmatpush1.msra.mxu0 %v263
        %285 = vmatprep.subr.mxu0 0.0
        %286 = vmatpush1.msra.mxu0 %v262
        %287 = vmatprep.subr.mxu0 0.0
        %288 = vmatpush1.msra.mxu0 %v261
        %289 = vmatprep.subr.mxu0 0.0
        %290 = vmatpush1.msra.mxu0 %v260
        %291 = vmatprep.subr.mxu0 0.0
        %292 = vmatpush1.msra.mxu0 %v259
        %293 = vmatprep.subr.mxu0 0.0
        %294 = vmatpush1.msra.mxu0 %v258
        %295 = vmatprep.subr.mxu0 0.0
        %296 = vmatpush1.msra.mxu0 %v257
        %297 = vmatprep.subr.mxu0 0.0
        %298 = vmatpush1.msra.mxu0 %v256
        %299 = vmatprep.subr.mxu0 0.0
        %300 = vmatpush1.msra.mxu0 %v255
        %301 = vmatprep.subr.mxu0 0.0
        %302 = vmatpush1.msra.mxu0 %v254
        %303 = vmatprep.subr.mxu0 0.0
        %304 = vmatpush1.msra.mxu0 %v253
        %305 = vmatprep.subr.mxu0 0.0
        %306 = vmatpush1.msra.mxu0 %v252
        %307 = vmatprep.subr.mxu0 0.0
        %308 = vmatpush2.msra.mxu0 0.0
        %309 = vmatprep.subr.mxu0 0.0
        %310 = vmatpush2.msra.mxu0 0.0
        %311 = vmatprep.subr.mxu0 0.0
        %312 = vmatpush2.msra.mxu0 0.0
        %313 = vmatprep.subr.mxu0 0.0
        %314 = vmatpush2.msra.mxu0 0.0
        %315 = vmatprep.subr.mxu0 0.0
        %316 = vmatpush2.msra.mxu0 0.0
        %317 = vmatprep.subr.mxu0 0.0
        %318 = vmatpush2.msra.mxu0 0.0
        %319 = vmatprep.subr.mxu0 0.0
        %320 = vmatpush2.msra.mxu0 0.0
        %321 = vmatprep.subr.mxu0 0.0
        %322 = vmatpush2.msra.mxu0 0.0
        %323 = vmatprep.subr.mxu0 0.0
        %324 = vmatpush2.msra.mxu0 0.0
        %325 = vmatprep.subr.mxu0 0.0
        %326 = vmatpush2.msra.mxu0 0.0
        %327 = vmatprep.subr.mxu0 0.0
        %328 = vmatpush2.msra.mxu0 0.0
        %329 = vmatprep.subr.mxu0 0.0
        %330 = vmatpush2.msra.mxu0 0.0
        %331 = vmatprep.subr.mxu0 0.0
        %332 = vmatpush2.msra.mxu0 0.0
        %333 = vmatprep.subr.mxu0 0.0
        %334 = vmatpush2.msra.mxu0 0.0
        %335 = vmatprep.subr.mxu0 0.0
        %336 = vmatpush2.msra.mxu0 0.0
        %337 = vmatprep.subr.mxu0 0.0
        %338 = vmatpush2.msra.mxu0 0.0
        %339 = vmatprep.mubr.f32.mxu0 0.0
        %340 = vmatmul.mubr.f32.gmra.mxu0 %v251
        %v341 = vpop.f32.mrf.mxu0
        %v342 = vadd.f32 %v273, %v341
        %v343 = vpop.f32.mrf.mxu0
        %344 = vdwg.mxu0
        %345 = vst [vmem:[%s246] sm:$0xff] %v342
        %s346 = sand.u32 %s132, 1
        %s347 = scalar_lea.sflag [#allocation4], %s346
        %s348 = sand.u32 %s132, 1
        %s349 = smul.addr %s348, 8
        %s350 = scalar_lea.vmem [#allocation7], %s349
        // Predicated region
        $region41: #{tpu_custom_call.1} parent=31 // pred_check
          %p351 = pneg %p142
        $region42: #{tpu_custom_call.1} parent=31 // pred_check_branch
          %353 = sbr.rel (%p351) target = $region44
        $region43: #{tpu_custom_call.1} parent=31 // pred_region
          %s355 = ssub.s32 128, 128
          %356 = vsyncadd %s347, %s355
          %s357 = sadd.s32 %s27, %s26
          %s358 = smul.addr %s357, 128
          %s359 = scalar_lea.hbm %s3, %s358
          %s361 = sshll.u32 %s350, 4
          %s362 = int_to_ptr.vmem [resolvable:$true] %s361
          %364 = dma.vmem_to_hbm [thread:$0]  %s362, 128, %s359, %s347
        $region44: #{tpu_custom_call.1} parent=31 // pred_fallthru
          _
      $region32: #{tpu_custom_call.1} parent=5 // pred_fallthru
        _
      %p365 = scmp.le.s32.totalorder 2, %s16
      // Predicated region
      $region45: #{tpu_custom_call.1} parent=5 // pred_check
        %p366 = pneg %p365
      $region46: #{tpu_custom_call.1} parent=5 // pred_check_branch
        %368 = sbr.rel (%p366) target = $region48
      $region47: #{tpu_custom_call.1} parent=5 // pred_region
        %s369 = ssub.s32 %s16, 2
        // Predicated region
        $region49: #{tpu_custom_call.1} parent=47 // pred_check
          %p370 = pneg %p148
        $region50: #{tpu_custom_call.1} parent=47 // pred_check_branch
          %372 = sbr.rel (%p370) target = $region52
        $region51: #{tpu_custom_call.1} parent=47 // pred_region
          %s373 = sand.u32 %s133, 1
          %s374 = scalar_lea.sflag [#allocation4], %s373
          %s375 = sand.u32 %s133, 1
          %s376 = smul.addr %s375, 8
          %s377 = scalar_lea.vmem [#allocation7], %s376
          %378 = dma.done %s374, 128
        $region52: #{tpu_custom_call.1} parent=47 // pred_fallthru
          _
      $region48: #{tpu_custom_call.1} parent=5 // pred_fallthru
        _
    $region6: #{tpu_custom_call.1} parent=1 // loop_footer
      %s20 = sadd.s32 1, %s16
    $region7: #{tpu_custom_call.1} parent=1 // loop_footer_branch
      %15 = sbr.rel target = $region3
    $region8: #{tpu_custom_call.1} parent=1 // loop_exit
      _
    %379 = vsyncpa [#allocation3], 1
    %s380 = scalar_lea.sflag [#allocation3], 1
    %381 = vsyncpa %s380, 1
    %382 = vsyncpa [#allocation6], 1
    %383 = vsyncpa [#allocation4], 1
    %s384 = scalar_lea.sflag [#allocation4], 1
    %385 = vsyncpa %s384, 1

</llo_original>
